<compile_context>
chip_gen: v7x
topology: tpu7x:2x2x1
jax: 0.10.0
libtpu: 0.0.40
codegen_flags: <defaults>
</compile_context>

<pallas_src>
import functools

import jax
import jax.numpy as jnp
from jax import lax
from jax.experimental import pallas as pl
from jax.experimental.pallas import tpu as pltpu


_NEG_BIG = -1e30  # effectively -inf bias for padded vocab columns


def _round_up(x, m):
    return (x + m - 1) // m * m


def _generator_kernel(x_ref, w_ref, b_ref, o_ref, m_ref, l_ref, logits_ref):
    """Fused linear + log_softmax, grid = (m_tiles, 2, vocab_tiles)."""
    p = pl.program_id(1)  # phase: 0 = accumulate, 1 = finalize
    j = pl.program_id(2)  # vocab tile

    @pl.when(jnp.logical_and(p == 0, j == 0))
    def _init():
        m_ref[...] = jnp.full(m_ref.shape, -jnp.inf, dtype=m_ref.dtype)
        l_ref[...] = jnp.zeros(l_ref.shape, dtype=l_ref.dtype)

    @pl.when(p == 0)
    def _accumulate():
        # (tm, d_model) . (tn, d_model)^T -> (tm, tn); contracting dim 1 of
        # both operands keeps the weight in nn.Linear layout (no transpose).
        logits = lax.dot_general(
            x_ref[...],
            w_ref[...],
            dimension_numbers=(((1,), (1,)), ((), ())),
            preferred_element_type=jnp.float32,
        )
        logits = logits + b_ref[...]
        logits_ref[j] = logits

        m_prev = m_ref[...]
        m_new = jnp.maximum(m_prev, jnp.max(logits, axis=-1, keepdims=True))
        l_ref[...] = l_ref[...] * jnp.exp(m_prev - m_new) + jnp.sum(
            jnp.exp(logits - m_new), axis=-1, keepdims=True
        )
        m_ref[...] = m_new

    @pl.when(p == 1)
    def _finalize():
        lse = m_ref[...] + jnp.log(l_ref[...])
        o_ref[...] = (logits_ref[j] - lse).astype(o_ref.dtype)


@functools.partial(jax.jit, static_argnames=("tm", "tn"))
def generator_forward(x, w, b, *, tm=256, tn=512):
    """log_softmax(x @ w.T + b, axis=-1).

    x: (batch, seq, d_model); w: (vocab, d_model) nn.Linear layout; b: (vocab,)
    Returns (batch, seq, vocab) in x.dtype.

    Tile guidance: tm=128 on v5e, 256 on v6e/v7x; tn a multiple of 128, sized
    so weight/output tiles + the tm*vocab_pad*4B logits scratch fit VMEM
    (64 MiB on v7x, 128 MiB on v5e/v6e).  Tiles are clamped to the (padded)
    problem size, so small inputs still work.
    """
    batch, seq, d_model = x.shape
    vocab = w.shape[0]
    out_dtype = x.dtype
    m_rows = batch * seq

    tm_eff = min(tm, _round_up(m_rows, 128))
    tn_eff = min(tn, _round_up(vocab, 128))
    m_pad = _round_up(m_rows, tm_eff)
    v_pad = _round_up(vocab, tn_eff)
    n_m = m_pad // tm_eff
    n_v = v_pad // tn_eff

    # bf16 matmul operands (f32 accumulation in-kernel), f32 bias.
    x2 = x.reshape(m_rows, d_model).astype(jnp.bfloat16)
    if m_pad != m_rows:
        x2 = jnp.pad(x2, ((0, m_pad - m_rows), (0, 0)))
    w2 = w.astype(jnp.bfloat16)
    b2 = b.astype(jnp.float32)
    if v_pad != vocab:
        w2 = jnp.pad(w2, ((0, v_pad - vocab), (0, 0)))
        # Padded vocab columns get a huge negative bias so exp() -> 0 and they
        # never affect the row-wise logsumexp; they are sliced off afterwards.
        b2 = jnp.pad(b2, (0, v_pad - vocab), constant_values=_NEG_BIG)
    b2 = b2.reshape(1, v_pad)

    out_bytes = jnp.dtype(out_dtype).itemsize
    vmem_bytes = (
        2 * tm_eff * d_model * 2            # x tile (bf16, double-buffered)
        + 2 * tn_eff * d_model * 2          # weight tile (bf16, double-buffered)
        + 2 * tn_eff * 4                    # bias tile
        + 2 * tm_eff * tn_eff * out_bytes   # output tile (double-buffered)
        + tm_eff * v_pad * 4                # resident logits scratch
        + 4 * tm_eff * 4                    # m / l scratch
    )
    # Keep the scoped limit modest so the plan also fits v7x's 64 MiB VMEM;
    # v6e can safely raise this for bigger tiles.
    vmem_limit = int(min(max(vmem_bytes + (8 << 20), 32 << 20), 48 << 20))

    out2 = pl.pallas_call(
        _generator_kernel,
        out_shape=jax.ShapeDtypeStruct((m_pad, v_pad), out_dtype),
        grid_spec=pltpu.PrefetchScalarGridSpec(
            num_scalar_prefetch=0,
            grid=(n_m, 2, n_v),
            in_specs=[
                # x tile stays resident across the phase + vocab sweep.
                pl.BlockSpec((tm_eff, d_model), lambda i, p, j: (i, 0)),
                # weight/bias stream over vocab in phase 0; in phase 1 the
                # index sticks at the last block so nothing is re-fetched.
                pl.BlockSpec(
                    (tn_eff, d_model),
                    lambda i, p, j: (j * (1 - p) + (n_v - 1) * p, 0),
                ),
                pl.BlockSpec(
                    (1, tn_eff),
                    lambda i, p, j: (0, j * (1 - p) + (n_v - 1) * p),
                ),
            ],
            # Lane-dense (tm, tn) output tiles, written only in phase 1.
            out_specs=pl.BlockSpec((tm_eff, tn_eff), lambda i, p, j: (i, j * p)),
            scratch_shapes=[
                pltpu.VMEM((tm_eff, 1), jnp.float32),           # running max
                pltpu.VMEM((tm_eff, 1), jnp.float32),           # running sum-exp
                pltpu.VMEM((n_v, tm_eff, tn_eff), jnp.float32),  # logits stash
            ],
        ),
        compiler_params=pltpu.CompilerParams(
            dimension_semantics=("parallel", "arbitrary", "arbitrary"),
            vmem_limit_bytes=vmem_limit,
        ),
    )(x2, w2, b2)

    return out2[:m_rows, :vocab].reshape(batch, seq, vocab)


if __name__ == "__main__":
    # Small but deliberately "ragged" shapes: batch*seq = 144 (not a tile
    # multiple) and vocab = 300 (not a multiple of 128) exercise the padding
    # and masking paths; tm=128/tn=128 exercises a multi-tile grid.
    batch, seq, d_model, vocab = 2, 72, 128, 300

    key = jax.random.PRNGKey(0)
    kx, kw, kb = jax.random.split(key, 3)

    x = jax.random.normal(kx, (batch, seq, d_model), dtype=jnp.float32)
    # nn.Linear(d_model, vocab) parameter shapes.
    w = jax.random.normal(kw, (vocab, d_model), dtype=jnp.float32) * 0.02
    b = jax.random.normal(kb, (vocab,), dtype=jnp.float32) * 0.02

    out = generator_forward(x, w, b, tm=128, tn=128)
    out = jax.block_until_ready(out)

    # Also exercise the default (clamped) tile path.
    out_default = generator_forward(x, w, b)
    out_default = jax.block_until_ready(out_default)

    # Reference in plain JAX with the same bf16 operand rounding.
    xb = x.astype(jnp.bfloat16).astype(jnp.float32)
    wb = w.astype(jnp.bfloat16).astype(jnp.float32)
    ref = jax.nn.log_softmax(jnp.einsum("bsd,vd->bsv", xb, wb) + b, axis=-1)

    assert out.shape == (batch, seq, vocab)
    assert jnp.allclose(out, ref, atol=1e-4, rtol=1e-4), float(
        jnp.max(jnp.abs(out - ref))
    )
    assert jnp.allclose(out_default, ref, atol=1e-4, rtol=1e-4), float(
        jnp.max(jnp.abs(out_default - ref))
    )

    print("KERNEL_OK")
</pallas_src>

<mosaic_0001>
module attributes {stable_mosaic.version = 11 : i64} {
  func.func @_generator_kernel(%arg0: i32, %arg1: i32, %arg2: i32, %arg3: memref<128x128xbf16, #tpu.memory_space<vmem>>, %arg4: memref<128x128xbf16, #tpu.memory_space<vmem>>, %arg5: memref<1x128xf32, #tpu.memory_space<vmem>>, %arg6: memref<128x128xf32, #tpu.memory_space<vmem>>, %arg7: memref<128x1xf32, #tpu.memory_space<vmem>>, %arg8: memref<128x1xf32, #tpu.memory_space<vmem>>, %arg9: memref<3x128x128xf32, #tpu.memory_space<vmem>>) attributes {dimension_semantics = [#tpu.dimension_semantics<parallel>, #tpu.dimension_semantics<arbitrary>, #tpu.dimension_semantics<arbitrary>], iteration_bounds = array<i64: 2, 2, 3>, scalar_prefetch = 0 : i64, scratch_operands = 3 : i64, tpu.core_type = #tpu.core_type<tc>, window_params = [{transform_indices = @transform_0, window_bounds = array<i64: 128, 128>}, {transform_indices = @transform_1, window_bounds = array<i64: 128, 128>}, {transform_indices = @transform_2, window_bounds = array<i64: 1, 128>}, {transform_indices = @transform_3, window_bounds = array<i64: 128, 128>}]} {
    %c0_i32 = arith.constant 0 : i32
    %0 = arith.cmpi eq, %arg1, %c0_i32 : i32
    %c0_i32_0 = arith.constant 0 : i32
    %1 = arith.cmpi eq, %arg2, %c0_i32_0 : i32
    %2 = arith.andi %0, %1 : i1
    %3 = arith.extui %2 : i1 to i32
    %c0_i32_1 = arith.constant 0 : i32
    %4 = arith.cmpi ne, %3, %c0_i32_1 : i32
    scf.if %4 {
      %cst = arith.constant 0xFF800000 : f32
      %11 = vector.broadcast %cst : f32 to vector<128x1xf32>
      %c0 = arith.constant 0 : index
      %c0_5 = arith.constant 0 : index
      %12 = vector.load %arg7[%c0, %c0_5] : memref<128x1xf32, #tpu.memory_space<vmem>>, vector<128x1xf32>
      tpu.vector_store %arg7[%c0, %c0_5], %11 {strides = array<i32>} : memref<128x1xf32, #tpu.memory_space<vmem>>, vector<128x1xf32>,
      %cst_6 = arith.constant 0.000000e+00 : f32
      %13 = vector.broadcast %cst_6 : f32 to vector<128x1xf32>
      %c0_7 = arith.constant 0 : index
      %c0_8 = arith.constant 0 : index
      %14 = vector.load %arg8[%c0_7, %c0_8] : memref<128x1xf32, #tpu.memory_space<vmem>>, vector<128x1xf32>
      tpu.vector_store %arg8[%c0_7, %c0_8], %13 {strides = array<i32>} : memref<128x1xf32, #tpu.memory_space<vmem>>, vector<128x1xf32>,
    } else {
    }
    %c0_i32_2 = arith.constant 0 : i32
    %5 = arith.cmpi eq, %arg1, %c0_i32_2 : i32
    %6 = arith.extui %5 : i1 to i32
    %c0_i32_3 = arith.constant 0 : i32
    %7 = arith.cmpi ne, %6, %c0_i32_3 : i32
    scf.if %7 {
      %c0 = arith.constant 0 : index
      %c0_5 = arith.constant 0 : index
      %11 = vector.load %arg3[%c0, %c0_5] : memref<128x128xbf16, #tpu.memory_space<vmem>>, vector<128x128xbf16>
      %c0_6 = arith.constant 0 : index
      %c0_7 = arith.constant 0 : index
      %12 = vector.load %arg4[%c0_6, %c0_7] : memref<128x128xbf16, #tpu.memory_space<vmem>>, vector<128x128xbf16>
      %cst = arith.constant dense<0.000000e+00> : vector<128x128xf32>
      %13 = tpu.matmul %11, %12, %cst {dimension_numbers = #tpu.dot_dimension_numbers<[1], [1], [0], [0], [0, 0, 1, 0], [], []>} : vector<128x128xbf16>, vector<128x128xbf16>, vector<128x128xf32> -> vector<128x128xf32>
      %c0_8 = arith.constant 0 : index
      %c0_9 = arith.constant 0 : index
      %14 = vector.load %arg5[%c0_8, %c0_9] : memref<1x128xf32, #tpu.memory_space<vmem>>, vector<1x128xf32>
      %15 = vector.broadcast %14 : vector<1x128xf32> to vector<128x128xf32>
      %16 = arith.addf %13, %15 : vector<128x128xf32>
      %17 = arith.index_cast %arg2 : i32 to index
      %c0_10 = arith.constant 0 : index
      %c0_11 = arith.constant 0 : index
      %18 = vector.load %arg9[%17, %c0_10, %c0_11] : memref<3x128x128xf32, #tpu.memory_space<vmem>>, vector<1x128x128xf32>
      %19 = vector.shape_cast %18 : vector<1x128x128xf32> to vector<128x128xf32>
      %20 = vector.shape_cast %16 : vector<128x128xf32> to vector<1x128x128xf32>
      tpu.vector_store %arg9[%17, %c0_10, %c0_11], %20 {strides = array<i32>} : memref<3x128x128xf32, #tpu.memory_space<vmem>>, vector<1x128x128xf32>,
      %c0_12 = arith.constant 0 : index
      %c0_13 = arith.constant 0 : index
      %21 = vector.load %arg7[%c0_12, %c0_13] : memref<128x1xf32, #tpu.memory_space<vmem>>, vector<128x1xf32>
      %cst_14 = arith.constant dense<0xFF800000> : vector<128xf32>
      %22 = vector.multi_reduction <maximumf>, %16, %cst_14 [1] : vector<128x128xf32> to vector<128xf32>
      %23 = vector.shape_cast %22 : vector<128xf32> to vector<128x1xf32>
      %24 = arith.maximumf %21, %23 : vector<128x1xf32>
      %c0_15 = arith.constant 0 : index
      %c0_16 = arith.constant 0 : index
      %25 = vector.load %arg8[%c0_15, %c0_16] : memref<128x1xf32, #tpu.memory_space<vmem>>, vector<128x1xf32>
      %26 = arith.subf %21, %24 : vector<128x1xf32>
      %27 = math.exp %26 : vector<128x1xf32>
      %28 = arith.mulf %25, %27 : vector<128x1xf32>
      %29 = vector.broadcast %24 : vector<128x1xf32> to vector<128x128xf32>
      %30 = arith.subf %16, %29 : vector<128x128xf32>
      %31 = math.exp %30 : vector<128x128xf32>
      %cst_17 = arith.constant dense<0.000000e+00> : vector<128xf32>
      %32 = vector.multi_reduction <add>, %31, %cst_17 [1] : vector<128x128xf32> to vector<128xf32>
      %33 = vector.shape_cast %32 : vector<128xf32> to vector<128x1xf32>
      %34 = arith.addf %28, %33 : vector<128x1xf32>
      %c0_18 = arith.constant 0 : index
      %c0_19 = arith.constant 0 : index
      %35 = vector.load %arg8[%c0_18, %c0_19] : memref<128x1xf32, #tpu.memory_space<vmem>>, vector<128x1xf32>
      tpu.vector_store %arg8[%c0_18, %c0_19], %34 {strides = array<i32>} : memref<128x1xf32, #tpu.memory_space<vmem>>, vector<128x1xf32>,
      %c0_20 = arith.constant 0 : index
      %c0_21 = arith.constant 0 : index
      %36 = vector.load %arg7[%c0_20, %c0_21] : memref<128x1xf32, #tpu.memory_space<vmem>>, vector<128x1xf32>
      tpu.vector_store %arg7[%c0_20, %c0_21], %24 {strides = array<i32>} : memref<128x1xf32, #tpu.memory_space<vmem>>, vector<128x1xf32>,
    } else {
    }
    %c1_i32 = arith.constant 1 : i32
    %8 = arith.cmpi eq, %arg1, %c1_i32 : i32
    %9 = arith.extui %8 : i1 to i32
    %c0_i32_4 = arith.constant 0 : i32
    %10 = arith.cmpi ne, %9, %c0_i32_4 : i32
    scf.if %10 {
      %c0 = arith.constant 0 : index
      %c0_5 = arith.constant 0 : index
      %11 = vector.load %arg7[%c0, %c0_5] : memref<128x1xf32, #tpu.memory_space<vmem>>, vector<128x1xf32>
      %c0_6 = arith.constant 0 : index
      %c0_7 = arith.constant 0 : index
      %12 = vector.load %arg8[%c0_6, %c0_7] : memref<128x1xf32, #tpu.memory_space<vmem>>, vector<128x1xf32>
      %13 = math.log %12 : vector<128x1xf32>
      %14 = arith.addf %11, %13 : vector<128x1xf32>
      %15 = arith.index_cast %arg2 : i32 to index
      %c0_8 = arith.constant 0 : index
      %c0_9 = arith.constant 0 : index
      %16 = vector.load %arg9[%15, %c0_8, %c0_9] : memref<3x128x128xf32, #tpu.memory_space<vmem>>, vector<1x128x128xf32>
      %17 = vector.shape_cast %16 : vector<1x128x128xf32> to vector<128x128xf32>
      %18 = vector.broadcast %14 : vector<128x1xf32> to vector<128x128xf32>
      %19 = arith.subf %17, %18 : vector<128x128xf32>
      %c0_10 = arith.constant 0 : index
      %c0_11 = arith.constant 0 : index
      %20 = vector.load %arg6[%c0_10, %c0_11] : memref<128x128xf32, #tpu.memory_space<vmem>>, vector<128x128xf32>
      tpu.vector_store %arg6[%c0_10, %c0_11], %19 {strides = array<i32>} : memref<128x128xf32, #tpu.memory_space<vmem>>, vector<128x128xf32>,
    } else {
    }
    return
  }
  func.func @transform_0(%arg0: i32, %arg1: i32, %arg2: i32) -> (i32, i32) {
    %c0_i32 = arith.constant 0 : i32
    %c0_i32_0 = arith.constant 0 : i32
    return %arg0, %c0_i32 : i32, i32
  }
  func.func @transform_1(%arg0: i32, %arg1: i32, %arg2: i32) -> (i32, i32) {
    %c1_i32 = arith.constant 1 : i32
    %0 = arith.subi %c1_i32, %arg1 : i32
    %1 = arith.muli %arg2, %0 : i32
    %c2_i32 = arith.constant 2 : i32
    %2 = arith.muli %c2_i32, %arg1 : i32
    %3 = arith.addi %1, %2 : i32
    %c0_i32 = arith.constant 0 : i32
    %c0_i32_0 = arith.constant 0 : i32
    return %3, %c0_i32 : i32, i32
  }
  func.func @transform_2(%arg0: i32, %arg1: i32, %arg2: i32) -> (i32, i32) {
    %c1_i32 = arith.constant 1 : i32
    %0 = arith.subi %c1_i32, %arg1 : i32
    %1 = arith.muli %arg2, %0 : i32
    %c2_i32 = arith.constant 2 : i32
    %2 = arith.muli %c2_i32, %arg1 : i32
    %3 = arith.addi %1, %2 : i32
    %c0_i32 = arith.constant 0 : i32
    %c0_i32_0 = arith.constant 0 : i32
    return %c0_i32, %3 : i32, i32
  }
  func.func @transform_3(%arg0: i32, %arg1: i32, %arg2: i32) -> (i32, i32) {
    %0 = arith.muli %arg2, %arg1 : i32
    %c0_i32 = arith.constant 0 : i32
    return %arg0, %0 : i32, i32
  }
}

</mosaic_0001>

<llo_original>
// kernel: generator_forward.1
$region0: #{generator_forward.1}
  #allocation0 [shape = 'u32[]', space=smem, size = 0x4, offset = 0x4, fixed_abs, tag = 'smem constant byte address 0x4 - core index']
  #allocation1 [shape = 'u32[144,128]{1,0:T(1,128)}', space=vmem, size = 0x12000, scoped, tag = 'internal scratch']
  #allocation2 [shape = 'f32[128,1]{1,0:T(8,128)}', space=vmem, size = 0x10000, scoped, tag = 'scratch operand']
  #allocation3 [shape = 'f32[128,1]{1,0:T(8,128)}', space=vmem, size = 0x10000, scoped, tag = 'scratch operand']
  #allocation4 [shape = 'f32[3,128,128]{2,1,0:T(8,128)}', space=vmem, size = 0x30000, scoped, tag = 'scratch operand']
  %s0 = inlined_call_operand.vmem [shape: bf16[256,128], index: 0, kind: input, shape index: {}]
  %s1 = inlined_call_operand.vmem [shape: bf16[384,128], index: 1, kind: input, shape index: {}]
  %s2 = inlined_call_operand.vmem [shape: f32[1,384], index: 2, kind: input, shape index: {}]
  %s3 = inlined_call_operand.vmem [shape: f32[256,384], index: 3, kind: output, shape index: {}]
  %s4 = sld [smem:[#allocation0]]
  $region91: #{generator_forward.1} parent=0
    _
  %s6 = ssub.s32 1, %s4
  %s7 = scalar_select 0, %s6, %s4
  $region1: #{generator_forward.1} parent=0
    #allocation5 [shape = 'u8[131072]{0}', space=vmem, size = 0x20000, scoped, tag = 'output window, operand 0']
    loop: start=0, step=1, limit=14
    $region2: #{generator_forward.1} parent=1 // loop_pre_header
      _
    $region3: #{generator_forward.1} parent=1 // loop_header
      %s9 = sphi 0, %s13
      %p10 = scmp.ge.s32.totalorder %s9, 14
      %s16 = sphi 0, %s35
      %s17 = sphi 0, %s31
      %s18 = sphi 0, %s27
      %s19 = sphi 0, %s16
      %s20 = sphi 0, %s17
      %s21 = sphi 0, %s18
      %s22 = sphi 0, %s19
      %s23 = sphi 0, %s20
      %s24 = sphi 0, %s21
      %s38 = sphi 0, %s40
      %s41 = sphi 0, %s38
      %s42 = sphi 0, %s41
      %s58 = sphi 0, %s42
      %s72 = sphi 0, %s74
      %s75 = sphi 0, %s72
      %s76 = sphi 0, %s75
      %s92 = sphi 0, %s76
      %s106 = sphi 0, %s108
      %s109 = sphi 0, %s106
      %s110 = sphi 0, %s109
      %s126 = sphi 0, %s110
      %s136 = sphi 0, %s138
      %s139 = sphi 0, %s136
      %s140 = sphi 0, %s139
      %s156 = sphi 0, %s140
    $region4: #{generator_forward.1} parent=1 // loop_header_branch
      %12 = sbr.rel (%p10) target = $region8
    $region5: #{generator_forward.1} parent=1 // loop_body
      %s14 = ssub.s32 %s9, 1
      %s15 = ssub.s32 %s9, 2
      %s25 = sadd.s32 1, %s18
      %p26 = scmp.ge.s32.totalorder %s25, 3
      %s27 = scalar_select %p26, 0, %s25
      %s28 = sadd.s32 1, %s17
      %s29 = scalar_select %p26, %s28, %s17
      %p30 = scmp.ge.s32.totalorder %s29, 2
      %s31 = scalar_select %p30, 0, %s29
      %s32 = sadd.s32 1, %s16
      %s33 = scalar_select %p30, %s32, %s16
      %p34 = scmp.ge.s32.totalorder %s33, 2
      %s35 = scalar_select %p34, 0, %s33
      %s36 = ssub.s32 %s16, %s35
      %p37 = scmp.eq.s32.totalorder %s36, 0
      %s39 = sadd.s32 %s38, 1
      %s40 = scalar_select %p37, %s38, %s39
      %p43 = pneg %p37
      %p44 = scmp.eq.s32.totalorder %s9, 11
      %p45 = por %p43, %p44
      %p46 = scmp.ne.s32.totalorder %s38, %s41
      %p47 = scmp.eq.s32.totalorder %s9, 0
      %p48 = por %p46, %p47
      %p49 = scmp.ne.s32.totalorder %s38, %s41
      %p50 = scmp.eq.s32.totalorder %s14, 11
      %p51 = por %p49, %p50
      %p52 = scmp.ne.s32.totalorder %s41, %s42
      %p53 = scmp.eq.s32.totalorder %s14, 0
      %p54 = por %p52, %p53
      %p55 = scmp.ne.s32.totalorder %s41, %s42
      %p56 = scmp.eq.s32.totalorder %s15, 11
      %p57 = por %p55, %p56
      %p59 = scmp.ne.s32.totalorder %s42, %s58
      %p60 = scmp.eq.s32.totalorder %s15, 0
      %p61 = por %p59, %p60
      %s62 = ssub.s32 1, %s17
      %s63 = smul.u32 %s18, %s62
      %s64 = smul.u32 %s17, 2
      %s65 = sadd.s32 %s63, %s64
      %s66 = ssub.s32 1, %s31
      %s67 = smul.u32 %s27, %s66
      %s68 = smul.u32 %s31, 2
      %s69 = sadd.s32 %s67, %s68
      %s70 = ssub.s32 %s65, %s69
      %p71 = scmp.eq.s32.totalorder %s70, 0
      %s73 = sadd.s32 %s72, 1
      %s74 = scalar_select %p71, %s72, %s73
      %p77 = pneg %p71
      %p78 = scmp.eq.s32.totalorder %s9, 11
      %p79 = por %p77, %p78
      %p80 = scmp.ne.s32.totalorder %s72, %s75
      %p81 = scmp.eq.s32.totalorder %s9, 0
      %p82 = por %p80, %p81
      %p83 = scmp.ne.s32.totalorder %s72, %s75
      %p84 = scmp.eq.s32.totalorder %s14, 11
      %p85 = por %p83, %p84
      %p86 = scmp.ne.s32.totalorder %s75, %s76
      %p87 = scmp.eq.s32.totalorder %s14, 0
      %p88 = por %p86, %p87
      %p89 = scmp.ne.s32.totalorder %s75, %s76
      %p90 = scmp.eq.s32.totalorder %s15, 11
      %p91 = por %p89, %p90
      %p93 = scmp.ne.s32.totalorder %s76, %s92
      %p94 = scmp.eq.s32.totalorder %s15, 0
      %p95 = por %p93, %p94
      %s96 = ssub.s32 1, %s17
      %s97 = smul.u32 %s18, %s96
      %s98 = smul.u32 %s17, 2
      %s99 = sadd.s32 %s97, %s98
      %s100 = ssub.s32 1, %s31
      %s101 = smul.u32 %s27, %s100
      %s102 = smul.u32 %s31, 2
      %s103 = sadd.s32 %s101, %s102
      %s104 = ssub.s32 %s99, %s103
      %p105 = scmp.eq.s32.totalorder %s104, 0
      %s107 = sadd.s32 %s106, 1
      %s108 = scalar_select %p105, %s106, %s107
      %p111 = pneg %p105
      %p112 = scmp.eq.s32.totalorder %s9, 11
      %p113 = por %p111, %p112
      %p114 = scmp.ne.s32.totalorder %s106, %s109
      %p115 = scmp.eq.s32.totalorder %s9, 0
      %p116 = por %p114, %p115
      %p117 = scmp.ne.s32.totalorder %s106, %s109
      %p118 = scmp.eq.s32.totalorder %s14, 11
      %p119 = por %p117, %p118
      %p120 = scmp.ne.s32.totalorder %s109, %s110
      %p121 = scmp.eq.s32.totalorder %s14, 0
      %p122 = por %p120, %p121
      %p123 = scmp.ne.s32.totalorder %s109, %s110
      %p124 = scmp.eq.s32.totalorder %s15, 11
      %p125 = por %p123, %p124
      %p127 = scmp.ne.s32.totalorder %s110, %s126
      %p128 = scmp.eq.s32.totalorder %s15, 0
      %p129 = por %p127, %p128
      %s130 = smul.u32 %s18, %s17
      %s131 = smul.u32 %s27, %s31
      %s132 = ssub.s32 %s16, %s35
      %s133 = ssub.s32 %s130, %s131
      %s134 = sor.u32 %s132, %s133
      %p135 = scmp.eq.s32.totalorder %s134, 0
      %s137 = sadd.s32 %s136, 1
      %s138 = scalar_select %p135, %s136, %s137
      %p141 = pneg %p135
      %p142 = scmp.eq.s32.totalorder %s9, 11
      %p143 = por %p141, %p142
      %p144 = scmp.ne.s32.totalorder %s136, %s139
      %p145 = scmp.eq.s32.totalorder %s9, 0
      %p146 = por %p144, %p145
      %p147 = scmp.ne.s32.totalorder %s136, %s139
      %p148 = scmp.eq.s32.totalorder %s14, 11
      %p149 = por %p147, %p148
      %p150 = scmp.ne.s32.totalorder %s139, %s140
      %p151 = scmp.eq.s32.totalorder %s14, 0
      %p152 = por %p150, %p151
      %p153 = scmp.ne.s32.totalorder %s139, %s140
      %p154 = scmp.eq.s32.totalorder %s15, 11
      %p155 = por %p153, %p154
      %p157 = scmp.ne.s32.totalorder %s140, %s156
      %p158 = scmp.eq.s32.totalorder %s15, 0
      %p159 = por %p157, %p158
      %p160 = scmp.le.s32.totalorder 1, %s9
      %p161 = scmp.lt.s32.totalorder %s9, 13
      %p162 = pnand %p160, %p161
      %p163 = pneg %p162
      // Predicated region
      $region9: #{generator_forward.1} parent=5 // pred_check
        _
      $region10: #{generator_forward.1} parent=5 // pred_check_branch
        %165 = sbr.rel (%p162) target = $region12
      $region11: #{generator_forward.1} parent=5 // pred_region
        %s166 = ssub.s32 %s9, 1
      $region12: #{generator_forward.1} parent=5 // pred_fallthru
        _
      %p167 = scmp.lt.s32.totalorder %s9, 12
      // Predicated region
      $region13: #{generator_forward.1} parent=5 // pred_check
        %p168 = pneg %p167
      $region14: #{generator_forward.1} parent=5 // pred_check_branch
        %170 = sbr.rel (%p168) target = $region16
      $region15: #{generator_forward.1} parent=5 // pred_region
        // Predicated region
        $region17: #{generator_forward.1} parent=15 // pred_check
          %p171 = pneg %p48
        $region18: #{generator_forward.1} parent=15 // pred_check_branch
          %173 = sbr.rel (%p171) target = $region20
        $region19: #{generator_forward.1} parent=15 // pred_region
          %s174 = smul.u32 16, %s16
          %p175 = scmp.lt.s32.totalorder %s174, 31
          %s176 = scalar_select %p175, %s174, 31
          %s177 = smul.addr %s176, 4
          %s178 = scalar_lea.vmem %s0, %s177
          %s179 = smul.u32 16, %s16
        $region20: #{generator_forward.1} parent=15 // pred_fallthru
          _
        // Predicated region
        $region21: #{generator_forward.1} parent=15 // pred_check
          %p180 = pneg %p82
        $region22: #{generator_forward.1} parent=15 // pred_check_branch
          %182 = sbr.rel (%p180) target = $region24
        $region23: #{generator_forward.1} parent=15 // pred_region
          %s183 = ssub.s32 1, %s17
          %s184 = smul.u32 %s18, %s183
          %s185 = smul.u32 %s17, 2
          %s186 = sadd.s32 %s184, %s185
          %s187 = smul.u32 16, %s186
          %p188 = scmp.lt.s32.totalorder %s187, 47
          %s189 = scalar_select %p188, %s187, 47
          %s190 = smul.addr %s189, 4
          %s191 = scalar_lea.vmem %s1, %s190
          %s192 = ssub.s32 1, %s17
          %s193 = smul.u32 %s18, %s192
          %s194 = smul.u32 %s17, 2
          %s195 = sadd.s32 %s193, %s194
          %s196 = smul.u32 16, %s195
        $region24: #{generator_forward.1} parent=15 // pred_fallthru
          _
        // Predicated region
        $region25: #{generator_forward.1} parent=15 // pred_check
          %p197 = pneg %p116
        $region26: #{generator_forward.1} parent=15 // pred_check_branch
          %199 = sbr.rel (%p197) target = $region28
        $region27: #{generator_forward.1} parent=15 // pred_region
          %s200 = ssub.s32 1, %s17
          %s201 = smul.u32 %s18, %s200
          %s202 = smul.u32 %s17, 2
          %s203 = sadd.s32 %s201, %s202
          %p204 = scmp.lt.s32.totalorder %s203, 2
          %s205 = scalar_select %p204, %s203, 2
          %s206 = scalar_lea.vmem %s2, %s205
          %s207 = ssub.s32 1, %s17
          %s208 = smul.u32 %s18, %s207
          %s209 = smul.u32 %s17, 2
          %s210 = sadd.s32 %s208, %s209
        $region28: #{generator_forward.1} parent=15 // pred_fallthru
          _
      $region16: #{generator_forward.1} parent=5 // pred_fallthru
        _
      %p211 = scmp.le.s32.totalorder 1, %s9
      %p212 = scmp.lt.s32.totalorder %s9, 13
      %p213 = pnand %p211, %p212
      %p214 = pneg %p213
      // Predicated region
      $region29: #{generator_forward.1} parent=5 // pred_check
        _
      $region30: #{generator_forward.1} parent=5 // pred_check_branch
        %216 = sbr.rel (%p213) target = $region32
      $region31: #{generator_forward.1} parent=5 // pred_region
        %s217 = ssub.s32 %s9, 1
        %s218 = smul.u32 16, %s19
        %p219 = scmp.lt.s32.totalorder %s218, 31
        %s220 = scalar_select %p219, %s218, 31
        %s221 = smul.addr %s220, 4
        %s222 = scalar_lea.vmem %s0, %s221
        %p223 = pneg %p54
        %p224 = pneg %p51
        %s225 = ssub.s32 1, %s20
        %s226 = smul.u32 %s21, %s225
        %s227 = smul.u32 %s20, 2
        %s228 = sadd.s32 %s226, %s227
        %s229 = smul.u32 16, %s228
        %p230 = scmp.lt.s32.totalorder %s229, 47
        %s231 = scalar_select %p230, %s229, 47
        %s232 = smul.addr %s231, 4
        %s233 = scalar_lea.vmem %s1, %s232
        %p234 = pneg %p88
        %p235 = pneg %p85
        %s236 = ssub.s32 1, %s20
        %s237 = smul.u32 %s21, %s236
        %s238 = smul.u32 %s20, 2
        %s239 = sadd.s32 %s237, %s238
        %p240 = scmp.lt.s32.totalorder %s239, 2
        %s241 = scalar_select %p240, %s239, 2
        %s242 = scalar_lea.vmem %s2, %s241
        %p243 = pneg %p122
        %p244 = pneg %p119
        %p245 = pneg %p152
        %p246 = pneg %p149
        %s247 = sand.u32 %s139, 1
        %s248 = sand.u32 %s139, 1
        %s249 = smul.addr %s248, 128
        %s250 = scalar_lea.vmem [#allocation5], %s249
        %s251 = smul.u32 16, %s19
        %p252 = scmp.lt.s32.totalorder %s251, 31
        %s253 = scalar_select %p252, %s251, 31
        %s254 = smul.addr %s253, 4
        %s255 = scalar_lea.vmem %s0, %s254
        %s256 = smul.u32 16, %s19
        %s257 = ssub.s32 1, %s20
        %s258 = smul.u32 %s21, %s257
        %s259 = smul.u32 %s20, 2
        %s260 = sadd.s32 %s258, %s259
        %s261 = smul.u32 16, %s260
        %p262 = scmp.lt.s32.totalorder %s261, 47
        %s263 = scalar_select %p262, %s261, 47
        %s264 = smul.addr %s263, 4
        %s265 = scalar_lea.vmem %s1, %s264
        %s266 = ssub.s32 1, %s20
        %s267 = smul.u32 %s21, %s266
        %s268 = smul.u32 %s20, 2
        %s269 = sadd.s32 %s267, %s268
        %s270 = smul.u32 16, %s269
        %s271 = ssub.s32 1, %s20
        %s272 = smul.u32 %s21, %s271
        %s273 = smul.u32 %s20, 2
        %s274 = sadd.s32 %s272, %s273
        %p275 = scmp.lt.s32.totalorder %s274, 2
        %s276 = scalar_select %p275, %s274, 2
        %s277 = scalar_lea.vmem %s2, %s276
        %s278 = ssub.s32 1, %s20
        %s279 = smul.u32 %s21, %s278
        %s280 = smul.u32 %s20, 2
        %s281 = sadd.s32 %s279, %s280
        %s282 = smul.u32 %s21, %s20
        %s283 = smul.u32 16, %s19
        %p285 = scmp.eq.s32.totalorder %s20, 0
        %p286 = scmp.eq.s32.totalorder %s21, 0
        %p287 = pnand %p285, %p286
        %p288 = pneg %p287
        // Predicated region
        $region33: #{generator_forward.1} parent=31 // pred_check
          _
        $region34: #{generator_forward.1} parent=31 // pred_check_branch
          %290 = sbr.rel (%p287) target = $region36
        $region35: #{generator_forward.1} parent=31 // pred_region
          %vm291 = vcmask 7168
          %292 = vst.msk [vmem:[#allocation2] sm:$0xff] %vm291, -inf
          %293 = vst.msk [vmem:[#allocation2 + $0x8] sm:$0xff] %vm291, -inf
          %294 = vst.msk [vmem:[#allocation2 + $0x10] sm:$0xff] %vm291, -inf
          %295 = vst.msk [vmem:[#allocation2 + $0x18] sm:$0xff] %vm291, -inf
          %296 = vst.msk [vmem:[#allocation2 + $0x20] sm:$0xff] %vm291, -inf
          %297 = vst.msk [vmem:[#allocation2 + $0x28] sm:$0xff] %vm291, -inf
          %298 = vst.msk [vmem:[#allocation2 + $0x30] sm:$0xff] %vm291, -inf
          %299 = vst.msk [vmem:[#allocation2 + $0x38] sm:$0xff] %vm291, -inf
          %300 = vst.msk [vmem:[#allocation2 + $0x40] sm:$0xff] %vm291, -inf
          %301 = vst.msk [vmem:[#allocation2 + $0x48] sm:$0xff] %vm291, -inf
          %302 = vst.msk [vmem:[#allocation2 + $0x50] sm:$0xff] %vm291, -inf
          %303 = vst.msk [vmem:[#allocation2 + $0x58] sm:$0xff] %vm291, -inf
          %304 = vst.msk [vmem:[#allocation2 + $0x60] sm:$0xff] %vm291, -inf
          %305 = vst.msk [vmem:[#allocation2 + $0x68] sm:$0xff] %vm291, -inf
          %306 = vst.msk [vmem:[#allocation2 + $0x70] sm:$0xff] %vm291, -inf
          %307 = vst.msk [vmem:[#allocation2 + $0x78] sm:$0xff] %vm291, -inf
          %308 = vst.msk [vmem:[#allocation3] sm:$0xff] %vm291, 0.0
          %309 = vst.msk [vmem:[#allocation3 + $0x8] sm:$0xff] %vm291, 0.0
          %310 = vst.msk [vmem:[#allocation3 + $0x10] sm:$0xff] %vm291, 0.0
          %311 = vst.msk [vmem:[#allocation3 + $0x18] sm:$0xff] %vm291, 0.0
          %312 = vst.msk [vmem:[#allocation3 + $0x20] sm:$0xff] %vm291, 0.0
          %313 = vst.msk [vmem:[#allocation3 + $0x28] sm:$0xff] %vm291, 0.0
          %314 = vst.msk [vmem:[#allocation3 + $0x30] sm:$0xff] %vm291, 0.0
          %315 = vst.msk [vmem:[#allocation3 + $0x38] sm:$0xff] %vm291, 0.0
          %316 = vst.msk [vmem:[#allocation3 + $0x40] sm:$0xff] %vm291, 0.0
          %317 = vst.msk [vmem:[#allocation3 + $0x48] sm:$0xff] %vm291, 0.0
          %318 = vst.msk [vmem:[#allocation3 + $0x50] sm:$0xff] %vm291, 0.0
          %319 = vst.msk [vmem:[#allocation3 + $0x58] sm:$0xff] %vm291, 0.0
          %320 = vst.msk [vmem:[#allocation3 + $0x60] sm:$0xff] %vm291, 0.0
          %321 = vst.msk [vmem:[#allocation3 + $0x68] sm:$0xff] %vm291, 0.0
          %322 = vst.msk [vmem:[#allocation3 + $0x70] sm:$0xff] %vm291, 0.0
          %323 = vst.msk [vmem:[#allocation3 + $0x78] sm:$0xff] %vm291, 0.0
        $region36: #{generator_forward.1} parent=31 // pred_fallthru
          _
        // Predicated region
        $region37: #{generator_forward.1} parent=31 // pred_check
          %p324 = pneg %p285
        $region38: #{generator_forward.1} parent=31 // pred_check_branch
          %326 = sbr.rel (%p324) target = $region40
        $region39: #{generator_forward.1} parent=31 // pred_region
          %v327 = vld [vmem:[%s255] sm:$0xf]
          %v328 = vld [vmem:[%s255 + $0x4] sm:$0xf]
          %v329 = vld [vmem:[%s255 + $0x8] sm:$0xf]
          %v330 = vld [vmem:[%s255 + $0xc] sm:$0xf]
          %v331 = vld [vmem:[%s255 + $0x10] sm:$0xf]
          %v332 = vld [vmem:[%s255 + $0x14] sm:$0xf]
          %v333 = vld [vmem:[%s255 + $0x18] sm:$0xf]
          %v334 = vld [vmem:[%s255 + $0x1c] sm:$0xf]
          %v335 = vld [vmem:[%s255 + $0x20] sm:$0xf]
          %v336 = vld [vmem:[%s255 + $0x24] sm:$0xf]
          %v337 = vld [vmem:[%s255 + $0x28] sm:$0xf]
          %v338 = vld [vmem:[%s255 + $0x2c] sm:$0xf]
          %v339 = vld [vmem:[%s255 + $0x30] sm:$0xf]
          %v340 = vld [vmem:[%s255 + $0x34] sm:$0xf]
          %v341 = vld [vmem:[%s255 + $0x38] sm:$0xf]
          %v342 = vld [vmem:[%s255 + $0x3c] sm:$0xf]
          %v343 = vld [vmem:[%s265] sm:$0xf]
          %v344 = vld [vmem:[%s265 + $0x4] sm:$0xf]
          %v345 = vld [vmem:[%s265 + $0x8] sm:$0xf]
          %v346 = vld [vmem:[%s265 + $0xc] sm:$0xf]
          %v347 = vld [vmem:[%s265 + $0x10] sm:$0xf]
          %v348 = vld [vmem:[%s265 + $0x14] sm:$0xf]
          %v349 = vld [vmem:[%s265 + $0x18] sm:$0xf]
          %v350 = vld [vmem:[%s265 + $0x1c] sm:$0xf]
          %v351 = vld [vmem:[%s265 + $0x20] sm:$0xf]
          %v352 = vld [vmem:[%s265 + $0x24] sm:$0xf]
          %v353 = vld [vmem:[%s265 + $0x28] sm:$0xf]
          %v354 = vld [vmem:[%s265 + $0x2c] sm:$0xf]
          %v355 = vld [vmem:[%s265 + $0x30] sm:$0xf]
          %v356 = vld [vmem:[%s265 + $0x34] sm:$0xf]
          %v357 = vld [vmem:[%s265 + $0x38] sm:$0xf]
          %v358 = vld [vmem:[%s265 + $0x3c] sm:$0xf]
          %v359 = vld [vmem:[%s277] sm:$0x1]
          %v361 = vlaneseq
          %v362 = vshrl.u32 %v361, 7
          %v363 = vsub.s32 0, %v362
          %v364 = vrot.slane %v359, %v363
          %v382 = vunpack.c.l.b16 %v327
          %v383 = vunpack.c.l.b16 %v328
          %v384 = vunpack.c.l.b16 %v329
          %v385 = vunpack.c.l.b16 %v330
          %v386 = vunpack.c.l.b16 %v331
          %v387 = vunpack.c.l.b16 %v332
          %v388 = vunpack.c.l.b16 %v333
          %v389 = vunpack.c.l.b16 %v334
          %v390 = vunpack.c.l.b16 %v335
          %v391 = vunpack.c.l.b16 %v336
          %v392 = vunpack.c.l.b16 %v337
          %v393 = vunpack.c.l.b16 %v338
          %v394 = vunpack.c.l.b16 %v339
          %v395 = vunpack.c.l.b16 %v340
          %v396 = vunpack.c.l.b16 %v341
          %v397 = vunpack.c.l.b16 %v342
          %v398 = vpack.c.b16 %v383, %v382
          %v399 = vpack.c.b16 %v385, %v384
          %v400 = vpack.c.b16 %v387, %v386
          %v401 = vpack.c.b16 %v389, %v388
          %v402 = vpack.c.b16 %v391, %v390
          %v403 = vpack.c.b16 %v393, %v392
          %v404 = vpack.c.b16 %v395, %v394
          %v405 = vpack.c.b16 %v397, %v396
          %v430 = vunpack.c.l.b16 %v343
          %v431 = vunpack.c.l.b16 %v344
          %v432 = vunpack.c.l.b16 %v345
          %v433 = vunpack.c.l.b16 %v346
          %v434 = vunpack.c.l.b16 %v347
          %v435 = vunpack.c.l.b16 %v348
          %v436 = vunpack.c.l.b16 %v349
          %v437 = vunpack.c.l.b16 %v350
          %v438 = vunpack.c.l.b16 %v351
          %v439 = vunpack.c.l.b16 %v352
          %v440 = vunpack.c.l.b16 %v353
          %v441 = vunpack.c.l.b16 %v354
          %v442 = vunpack.c.l.b16 %v355
          %v443 = vunpack.c.l.b16 %v356
          %v444 = vunpack.c.l.b16 %v357
          %v445 = vunpack.c.l.b16 %v358
          %v446 = vpack.c.b16 %v431, %v430
          %v447 = vpack.c.b16 %v433, %v432
          %v448 = vpack.c.b16 %v435, %v434
          %v449 = vpack.c.b16 %v437, %v436
          %v450 = vpack.c.b16 %v439, %v438
          %v451 = vpack.c.b16 %v441, %v440
          %v452 = vpack.c.b16 %v443, %v442
          %v453 = vpack.c.b16 %v445, %v444
          %462 = vmatprep.subr.bf16.mxu0 0
          %463 = vmatpush1.bf16.xpose.msra.mxu0 %v446
          %464 = vmatprep.subr.bf16.mxu0 0
          %465 = vmatpush1.bf16.xpose.msra.mxu0 %v447
          %466 = vmatprep.subr.bf16.mxu0 0
          %467 = vmatpush1.bf16.xpose.msra.mxu0 %v448
          %468 = vmatprep.subr.bf16.mxu0 0
          %469 = vmatpush1.bf16.xpose.msra.mxu0 %v449
          %470 = vmatprep.subr.bf16.mxu0 0
          %471 = vmatpush1.bf16.xpose.msra.mxu0 %v450
          %472 = vmatprep.subr.bf16.mxu0 0
          %473 = vmatpush1.bf16.xpose.msra.mxu0 %v451
          %474 = vmatprep.subr.bf16.mxu0 0
          %475 = vmatpush1.bf16.xpose.msra.mxu0 %v452
          %476 = vmatprep.subr.bf16.mxu0 0
          %477 = vmatpush1.bf16.xpose.msra.mxu0 %v453
          %478 = vmatprep.subr.bf16.mxu0 0
          %479 = vmatpush1.bf16.xpose.msra.mxu0 0
          %480 = vmatprep.subr.bf16.mxu0 0
          %481 = vmatpush1.bf16.xpose.msra.mxu0 0
          %482 = vmatprep.subr.bf16.mxu0 0
          %483 = vmatpush1.bf16.xpose.msra.mxu0 0
          %484 = vmatprep.subr.bf16.mxu0 0
          %485 = vmatpush1.bf16.xpose.msra.mxu0 0
          %486 = vmatprep.subr.bf16.mxu0 0
          %487 = vmatpush1.bf16.xpose.msra.mxu0 0
          %488 = vmatprep.subr.bf16.mxu0 0
          %489 = vmatpush1.bf16.xpose.msra.mxu0 0
          %490 = vmatprep.subr.bf16.mxu0 0
          %491 = vmatpush1.bf16.xpose.msra.mxu0 0
          %492 = vmatprep.subr.bf16.mxu0 0
          %493 = vmatpush1.bf16.xpose.msra.mxu0 0
          %494 = vmatprep.mubr.bf16.mxu0 0
          %495 = vmatmul.mubr.bf16.gmra.mrb[0].mxu0 %v398
          %v496 = vpop.f32.mrb[0].mxu0
          %v497 = vadd.f32 %v364, %v496
          %v498 = vpop.f32.mrb[0].mxu0
          %v499 = vpop.f32.mrb[0].mxu0
          %v500 = vadd.f32 %v364, %v499
          %v501 = vpop.f32.mrb[0].mxu0
          %502 = vmatprep.mubr.bf16.mxu0 0
          %503 = vmatmul.mubr.bf16.gmra.mrb[0].mxu0 %v399
          %v504 = vpop.f32.mrb[0].mxu0
          %v505 = vadd.f32 %v364, %v504
          %v506 = vpop.f32.mrb[0].mxu0
          %v507 = vpop.f32.mrb[0].mxu0
          %v508 = vadd.f32 %v364, %v507
          %v509 = vpop.f32.mrb[0].mxu0
          %510 = vmatprep.mubr.bf16.mxu0 0
          %511 = vmatmul.mubr.bf16.gmra.mrb[0].mxu0 %v400
          %v512 = vpop.f32.mrb[0].mxu0
          %v513 = vadd.f32 %v364, %v512
          %v514 = vpop.f32.mrb[0].mxu0
          %v515 = vpop.f32.mrb[0].mxu0
          %v516 = vadd.f32 %v364, %v515
          %v517 = vpop.f32.mrb[0].mxu0
          %518 = vmatprep.mubr.bf16.mxu0 0
          %519 = vmatmul.mubr.bf16.gmra.mrb[0].mxu0 %v401
          %v520 = vpop.f32.mrb[0].mxu0
          %v521 = vadd.f32 %v364, %v520
          %v522 = vpop.f32.mrb[0].mxu0
          %v523 = vpop.f32.mrb[0].mxu0
          %v524 = vadd.f32 %v364, %v523
          %v525 = vpop.f32.mrb[0].mxu0
          %526 = vmatprep.mubr.bf16.mxu0 0
          %527 = vmatmul.mubr.bf16.gmra.mrb[0].mxu0 %v402
          %v528 = vpop.f32.mrb[0].mxu0
          %v529 = vadd.f32 %v364, %v528
          %v530 = vpop.f32.mrb[0].mxu0
          %v531 = vpop.f32.mrb[0].mxu0
          %v532 = vadd.f32 %v364, %v531
          %v533 = vpop.f32.mrb[0].mxu0
          %534 = vmatprep.mubr.bf16.mxu0 0
          %535 = vmatmul.mubr.bf16.gmra.mrb[0].mxu0 %v403
          %v536 = vpop.f32.mrb[0].mxu0
          %v537 = vadd.f32 %v364, %v536
          %v538 = vpop.f32.mrb[0].mxu0
          %v539 = vpop.f32.mrb[0].mxu0
          %v540 = vadd.f32 %v364, %v539
          %v541 = vpop.f32.mrb[0].mxu0
          %542 = vmatprep.mubr.bf16.mxu0 0
          %543 = vmatmul.mubr.bf16.gmra.mrb[0].mxu0 %v404
          %v544 = vpop.f32.mrb[0].mxu0
          %v545 = vadd.f32 %v364, %v544
          %v546 = vpop.f32.mrb[0].mxu0
          %v547 = vpop.f32.mrb[0].mxu0
          %v548 = vadd.f32 %v364, %v547
          %v549 = vpop.f32.mrb[0].mxu0
          %550 = vmatprep.mubr.bf16.mxu0 0
          %551 = vmatmul.mubr.bf16.gmra.mrb[0].mxu0 %v405
          %v552 = vpop.f32.mrb[0].mxu0
          %v553 = vadd.f32 %v364, %v552
          %v554 = vpop.f32.mrb[0].mxu0
          %v555 = vpop.f32.mrb[0].mxu0
          %v556 = vadd.f32 %v364, %v555
          %v557 = vpop.f32.mrb[0].mxu0
          %558 = vdwg.mxu0
          %s559 = smul.u32 %s21, 128
          %s560 = scalar_lea.vmem [#allocation4], %s559
          %561 = vst [vmem:[%s560] sm:$0xff] %v497
          %562 = vst [vmem:[%s560 + $0x8] sm:$0xff] %v500
          %563 = vst [vmem:[%s560 + $0x10] sm:$0xff] %v505
          %564 = vst [vmem:[%s560 + $0x18] sm:$0xff] %v508
          %565 = vst [vmem:[%s560 + $0x20] sm:$0xff] %v513
          %566 = vst [vmem:[%s560 + $0x28] sm:$0xff] %v516
          %567 = vst [vmem:[%s560 + $0x30] sm:$0xff] %v521
          %568 = vst [vmem:[%s560 + $0x38] sm:$0xff] %v524
          %569 = vst [vmem:[%s560 + $0x40] sm:$0xff] %v529
          %570 = vst [vmem:[%s560 + $0x48] sm:$0xff] %v532
          %571 = vst [vmem:[%s560 + $0x50] sm:$0xff] %v537
          %572 = vst [vmem:[%s560 + $0x58] sm:$0xff] %v540
          %573 = vst [vmem:[%s560 + $0x60] sm:$0xff] %v545
          %574 = vst [vmem:[%s560 + $0x68] sm:$0xff] %v548
          %575 = vst [vmem:[%s560 + $0x70] sm:$0xff] %v553
          %576 = vst [vmem:[%s560 + $0x78] sm:$0xff] %v556
          %v577 = vld [vmem:[#allocation2] sm:$0xff]
          %v578 = vld [vmem:[#allocation2 + $0x8] sm:$0xff]
          %v579 = vld [vmem:[#allocation2 + $0x10] sm:$0xff]
          %v580 = vld [vmem:[#allocation2 + $0x18] sm:$0xff]
          %v581 = vld [vmem:[#allocation2 + $0x20] sm:$0xff]
          %v582 = vld [vmem:[#allocation2 + $0x28] sm:$0xff]
          %v583 = vld [vmem:[#allocation2 + $0x30] sm:$0xff]
          %v584 = vld [vmem:[#allocation2 + $0x38] sm:$0xff]
          %v585 = vld [vmem:[#allocation2 + $0x40] sm:$0xff]
          %v586 = vld [vmem:[#allocation2 + $0x48] sm:$0xff]
          %v587 = vld [vmem:[#allocation2 + $0x50] sm:$0xff]
          %v588 = vld [vmem:[#allocation2 + $0x58] sm:$0xff]
          %v589 = vld [vmem:[#allocation2 + $0x60] sm:$0xff]
          %v590 = vld [vmem:[#allocation2 + $0x68] sm:$0xff]
          %v591 = vld [vmem:[#allocation2 + $0x70] sm:$0xff]
          %v592 = vld [vmem:[#allocation2 + $0x78] sm:$0xff]
          %593 = vmax.xlane.f32.xlu0 %v497
          %v594 = vpop.xlane.xlu0 %593
          %595 = vmax.xlane.f32.xlu0 %v500
          %v596 = vpop.xlane.xlu0 %595
          %597 = vmax.xlane.f32.xlu0 %v505
          %v598 = vpop.xlane.xlu0 %597
          %599 = vmax.xlane.f32.xlu0 %v508
          %v600 = vpop.xlane.xlu0 %599
          %601 = vmax.xlane.f32.xlu0 %v513
          %v602 = vpop.xlane.xlu0 %601
          %603 = vmax.xlane.f32.xlu0 %v516
          %v604 = vpop.xlane.xlu0 %603
          %605 = vmax.xlane.f32.xlu0 %v521
          %v606 = vpop.xlane.xlu0 %605
          %607 = vmax.xlane.f32.xlu0 %v524
          %v608 = vpop.xlane.xlu0 %607
          %609 = vmax.xlane.f32.xlu0 %v529
          %v610 = vpop.xlane.xlu0 %609
          %611 = vmax.xlane.f32.xlu0 %v532
          %v612 = vpop.xlane.xlu0 %611
          %613 = vmax.xlane.f32.xlu0 %v537
          %v614 = vpop.xlane.xlu0 %613
          %615 = vmax.xlane.f32.xlu0 %v540
          %v616 = vpop.xlane.xlu0 %615
          %617 = vmax.xlane.f32.xlu0 %v545
          %v618 = vpop.xlane.xlu0 %617
          %619 = vmax.xlane.f32.xlu0 %v548
          %v620 = vpop.xlane.xlu0 %619
          %621 = vmax.xlane.f32.xlu0 %v553
          %v622 = vpop.xlane.xlu0 %621
          %623 = vmax.xlane.f32.xlu0 %v556
          %v624 = vpop.xlane.xlu0 %623
          %v625 = vmax.f32 %v577, %v594
          %v626 = vmax.f32 %v578, %v596
          %v627 = vmax.f32 %v579, %v598
          %v628 = vmax.f32 %v580, %v600
          %v629 = vmax.f32 %v581, %v602
          %v630 = vmax.f32 %v582, %v604
          %v631 = vmax.f32 %v583, %v606
          %v632 = vmax.f32 %v584, %v608
          %v633 = vmax.f32 %v585, %v610
          %v634 = vmax.f32 %v586, %v612
          %v635 = vmax.f32 %v587, %v614
          %v636 = vmax.f32 %v588, %v616
          %v637 = vmax.f32 %v589, %v618
          %v638 = vmax.f32 %v590, %v620
          %v639 = vmax.f32 %v591, %v622
          %v640 = vmax.f32 %v592, %v624
          %v641 = vld [vmem:[#allocation3] sm:$0xff]
          %v642 = vld [vmem:[#allocation3 + $0x8] sm:$0xff]
          %v643 = vld [vmem:[#allocation3 + $0x10] sm:$0xff]
          %v644 = vld [vmem:[#allocation3 + $0x18] sm:$0xff]
          %v645 = vld [vmem:[#allocation3 + $0x20] sm:$0xff]
          %v646 = vld [vmem:[#allocation3 + $0x28] sm:$0xff]
          %v647 = vld [vmem:[#allocation3 + $0x30] sm:$0xff]
          %v648 = vld [vmem:[#allocation3 + $0x38] sm:$0xff]
          %v649 = vld [vmem:[#allocation3 + $0x40] sm:$0xff]
          %v650 = vld [vmem:[#allocation3 + $0x48] sm:$0xff]
          %v651 = vld [vmem:[#allocation3 + $0x50] sm:$0xff]
          %v652 = vld [vmem:[#allocation3 + $0x58] sm:$0xff]
          %v653 = vld [vmem:[#allocation3 + $0x60] sm:$0xff]
          %v654 = vld [vmem:[#allocation3 + $0x68] sm:$0xff]
          %v655 = vld [vmem:[#allocation3 + $0x70] sm:$0xff]
          %v656 = vld [vmem:[#allocation3 + $0x78] sm:$0xff]
          %v657 = vsub.f32 %v577, %v625
          %v658 = vsub.f32 %v578, %v626
          %v659 = vsub.f32 %v579, %v627
          %v660 = vsub.f32 %v580, %v628
          %v661 = vsub.f32 %v581, %v629
          %v662 = vsub.f32 %v582, %v630
          %v663 = vsub.f32 %v583, %v631
          %v664 = vsub.f32 %v584, %v632
          %v665 = vsub.f32 %v585, %v633
          %v666 = vsub.f32 %v586, %v634
          %v667 = vsub.f32 %v587, %v635
          %v668 = vsub.f32 %v588, %v636
          %v669 = vsub.f32 %v589, %v637
          %v670 = vsub.f32 %v590, %v638
          %v671 = vsub.f32 %v591, %v639
          %v672 = vsub.f32 %v592, %v640
          %v673 = vmul.f32 %v657, 1.442695
          %v674 = vpow.pop %v673
          %v675 = vmul.f32 %v658, 1.442695
          %v676 = vpow.pop %v675
          %v677 = vmul.f32 %v659, 1.442695
          %v678 = vpow.pop %v677
          %v679 = vmul.f32 %v660, 1.442695
          %v680 = vpow.pop %v679
          %v681 = vmul.f32 %v661, 1.442695
          %v682 = vpow.pop %v681
          %v683 = vmul.f32 %v662, 1.442695
          %v684 = vpow.pop %v683
          %v685 = vmul.f32 %v663, 1.442695
          %v686 = vpow.pop %v685
          %v687 = vmul.f32 %v664, 1.442695
          %v688 = vpow.pop %v687
          %v689 = vmul.f32 %v665, 1.442695
          %v690 = vpow.pop %v689
          %v691 = vmul.f32 %v666, 1.442695
          %v692 = vpow.pop %v691
          %v693 = vmul.f32 %v667, 1.442695
          %v694 = vpow.pop %v693
          %v695 = vmul.f32 %v668, 1.442695
          %v696 = vpow.pop %v695
          %v697 = vmul.f32 %v669, 1.442695
          %v698 = vpow.pop %v697
          %v699 = vmul.f32 %v670, 1.442695
          %v700 = vpow.pop %v699
          %v701 = vmul.f32 %v671, 1.442695
          %v702 = vpow.pop %v701
          %v703 = vmul.f32 %v672, 1.442695
          %v704 = vpow.pop %v703
          %v705 = vmul.f32 %v641, %v674
          %v706 = vmul.f32 %v642, %v676
          %v707 = vmul.f32 %v643, %v678
          %v708 = vmul.f32 %v644, %v680
          %v709 = vmul.f32 %v645, %v682
          %v710 = vmul.f32 %v646, %v684
          %v711 = vmul.f32 %v647, %v686
          %v712 = vmul.f32 %v648, %v688
          %v713 = vmul.f32 %v649, %v690
          %v714 = vmul.f32 %v650, %v692
          %v715 = vmul.f32 %v651, %v694
          %v716 = vmul.f32 %v652, %v696
          %v717 = vmul.f32 %v653, %v698
          %v718 = vmul.f32 %v654, %v700
          %v719 = vmul.f32 %v655, %v702
          %v720 = vmul.f32 %v656, %v704
          %722 = vset.pattern.permute.xlu0 0
          %723 = vperm.xlu0 %722, %v625
          %v724 = vpop.permute.xlu0 %723
          %727 = vset.pattern.permute.xlu0 0
          %728 = vperm.xlu0 %727, %v626
          %v729 = vpop.permute.xlu0 %728
          %732 = vset.pattern.permute.xlu0 0
          %733 = vperm.xlu0 %732, %v627
          %v734 = vpop.permute.xlu0 %733
          %737 = vset.pattern.permute.xlu0 0
          %738 = vperm.xlu0 %737, %v628
          %v739 = vpop.permute.xlu0 %738
          %742 = vset.pattern.permute.xlu0 0
          %743 = vperm.xlu0 %742, %v629
          %v744 = vpop.permute.xlu0 %743
          %747 = vset.pattern.permute.xlu0 0
          %748 = vperm.xlu0 %747, %v630
          %v749 = vpop.permute.xlu0 %748
          %752 = vset.pattern.permute.xlu0 0
          %753 = vperm.xlu0 %752, %v631
          %v754 = vpop.permute.xlu0 %753
          %757 = vset.pattern.permute.xlu0 0
          %758 = vperm.xlu0 %757, %v632
          %v759 = vpop.permute.xlu0 %758
          %762 = vset.pattern.permute.xlu0 0
          %763 = vperm.xlu0 %762, %v633
          %v764 = vpop.permute.xlu0 %763
          %767 = vset.pattern.permute.xlu0 0
          %768 = vperm.xlu0 %767, %v634
          %v769 = vpop.permute.xlu0 %768
          %772 = vset.pattern.permute.xlu0 0
          %773 = vperm.xlu0 %772, %v635
          %v774 = vpop.permute.xlu0 %773
          %777 = vset.pattern.permute.xlu0 0
          %778 = vperm.xlu0 %777, %v636
          %v779 = vpop.permute.xlu0 %778
          %782 = vset.pattern.permute.xlu0 0
          %783 = vperm.xlu0 %782, %v637
          %v784 = vpop.permute.xlu0 %783
          %787 = vset.pattern.permute.xlu0 0
          %788 = vperm.xlu0 %787, %v638
          %v789 = vpop.permute.xlu0 %788
          %792 = vset.pattern.permute.xlu0 0
          %793 = vperm.xlu0 %792, %v639
          %v794 = vpop.permute.xlu0 %793
          %797 = vset.pattern.permute.xlu0 0
          %798 = vperm.xlu0 %797, %v640
          %v799 = vpop.permute.xlu0 %798
          %v801 = vsub.f32 %v497, %v724
          %v802 = vsub.f32 %v500, %v729
          %v803 = vsub.f32 %v505, %v734
          %v804 = vsub.f32 %v508, %v739
          %v805 = vsub.f32 %v513, %v744
          %v806 = vsub.f32 %v516, %v749
          %v807 = vsub.f32 %v521, %v754
          %v808 = vsub.f32 %v524, %v759
          %v809 = vsub.f32 %v529, %v764
          %v810 = vsub.f32 %v532, %v769
          %v811 = vsub.f32 %v537, %v774
          %v812 = vsub.f32 %v540, %v779
          %v813 = vsub.f32 %v545, %v784
          %v814 = vsub.f32 %v548, %v789
          %v815 = vsub.f32 %v553, %v794
          %v816 = vsub.f32 %v556, %v799
          %v817 = vmul.f32 %v801, 1.442695
          %v818 = vpow.pop %v817
          %v819 = vmul.f32 %v802, 1.442695
          %v820 = vpow.pop %v819
          %v821 = vmul.f32 %v803, 1.442695
          %v822 = vpow.pop %v821
          %v823 = vmul.f32 %v804, 1.442695
          %v824 = vpow.pop %v823
          %v825 = vmul.f32 %v805, 1.442695
          %v826 = vpow.pop %v825
          %v827 = vmul.f32 %v806, 1.442695
          %v828 = vpow.pop %v827
          %v829 = vmul.f32 %v807, 1.442695
          %v830 = vpow.pop %v829
          %v831 = vmul.f32 %v808, 1.442695
          %v832 = vpow.pop %v831
          %v833 = vmul.f32 %v809, 1.442695
          %v834 = vpow.pop %v833
          %v835 = vmul.f32 %v810, 1.442695
          %v836 = vpow.pop %v835
          %v837 = vmul.f32 %v811, 1.442695
          %v838 = vpow.pop %v837
          %v839 = vmul.f32 %v812, 1.442695
          %v840 = vpow.pop %v839
          %v841 = vmul.f32 %v813, 1.442695
          %v842 = vpow.pop %v841
          %v843 = vmul.f32 %v814, 1.442695
          %v844 = vpow.pop %v843
          %v845 = vmul.f32 %v815, 1.442695
          %v846 = vpow.pop %v845
          %v847 = vmul.f32 %v816, 1.442695
          %v848 = vpow.pop %v847
          %849 = vadd.xlane.f32.xlu0 %v818
          %v850 = vpop.xlane.xlu0 %849
          %851 = vadd.xlane.f32.xlu0 %v820
          %v852 = vpop.xlane.xlu0 %851
          %853 = vadd.xlane.f32.xlu0 %v822
          %v854 = vpop.xlane.xlu0 %853
          %855 = vadd.xlane.f32.xlu0 %v824
          %v856 = vpop.xlane.xlu0 %855
          %857 = vadd.xlane.f32.xlu0 %v826
          %v858 = vpop.xlane.xlu0 %857
          %859 = vadd.xlane.f32.xlu0 %v828
          %v860 = vpop.xlane.xlu0 %859
          %861 = vadd.xlane.f32.xlu0 %v830
          %v862 = vpop.xlane.xlu0 %861
          %863 = vadd.xlane.f32.xlu0 %v832
          %v864 = vpop.xlane.xlu0 %863
          %865 = vadd.xlane.f32.xlu0 %v834
          %v866 = vpop.xlane.xlu0 %865
          %867 = vadd.xlane.f32.xlu0 %v836
          %v868 = vpop.xlane.xlu0 %867
          %869 = vadd.xlane.f32.xlu0 %v838
          %v870 = vpop.xlane.xlu0 %869
          %871 = vadd.xlane.f32.xlu0 %v840
          %v872 = vpop.xlane.xlu0 %871
          %873 = vadd.xlane.f32.xlu0 %v842
          %v874 = vpop.xlane.xlu0 %873
          %875 = vadd.xlane.f32.xlu0 %v844
          %v876 = vpop.xlane.xlu0 %875
          %877 = vadd.xlane.f32.xlu0 %v846
          %v878 = vpop.xlane.xlu0 %877
          %879 = vadd.xlane.f32.xlu0 %v848
          %v880 = vpop.xlane.xlu0 %879
          %v881 = vadd.f32 %v705, %v850
          %v882 = vadd.f32 %v706, %v852
          %v883 = vadd.f32 %v707, %v854
          %v884 = vadd.f32 %v708, %v856
          %v885 = vadd.f32 %v709, %v858
          %v886 = vadd.f32 %v710, %v860
          %v887 = vadd.f32 %v711, %v862
          %v888 = vadd.f32 %v712, %v864
          %v889 = vadd.f32 %v713, %v866
          %v890 = vadd.f32 %v714, %v868
          %v891 = vadd.f32 %v715, %v870
          %v892 = vadd.f32 %v716, %v872
          %v893 = vadd.f32 %v717, %v874
          %v894 = vadd.f32 %v718, %v876
          %v895 = vadd.f32 %v719, %v878
          %v896 = vadd.f32 %v720, %v880
          %vm897 = vcmask 7168
          %898 = vst.msk [vmem:[#allocation3] sm:$0xff] %vm897, %v881
          %899 = vst.msk [vmem:[#allocation3 + $0x8] sm:$0xff] %vm897, %v882
          %900 = vst.msk [vmem:[#allocation3 + $0x10] sm:$0xff] %vm897, %v883
          %901 = vst.msk [vmem:[#allocation3 + $0x18] sm:$0xff] %vm897, %v884
          %902 = vst.msk [vmem:[#allocation3 + $0x20] sm:$0xff] %vm897, %v885
          %903 = vst.msk [vmem:[#allocation3 + $0x28] sm:$0xff] %vm897, %v886
          %904 = vst.msk [vmem:[#allocation3 + $0x30] sm:$0xff] %vm897, %v887
          %905 = vst.msk [vmem:[#allocation3 + $0x38] sm:$0xff] %vm897, %v888
          %906 = vst.msk [vmem:[#allocation3 + $0x40] sm:$0xff] %vm897, %v889
          %907 = vst.msk [vmem:[#allocation3 + $0x48] sm:$0xff] %vm897, %v890
          %908 = vst.msk [vmem:[#allocation3 + $0x50] sm:$0xff] %vm897, %v891
          %909 = vst.msk [vmem:[#allocation3 + $0x58] sm:$0xff] %vm897, %v892
          %910 = vst.msk [vmem:[#allocation3 + $0x60] sm:$0xff] %vm897, %v893
          %911 = vst.msk [vmem:[#allocation3 + $0x68] sm:$0xff] %vm897, %v894
          %912 = vst.msk [vmem:[#allocation3 + $0x70] sm:$0xff] %vm897, %v895
          %913 = vst.msk [vmem:[#allocation3 + $0x78] sm:$0xff] %vm897, %v896
          %914 = vst.msk [vmem:[#allocation2] sm:$0xff] %vm897, %v625
          %915 = vst.msk [vmem:[#allocation2 + $0x8] sm:$0xff] %vm897, %v626
          %916 = vst.msk [vmem:[#allocation2 + $0x10] sm:$0xff] %vm897, %v627
          %917 = vst.msk [vmem:[#allocation2 + $0x18] sm:$0xff] %vm897, %v628
          %918 = vst.msk [vmem:[#allocation2 + $0x20] sm:$0xff] %vm897, %v629
          %919 = vst.msk [vmem:[#allocation2 + $0x28] sm:$0xff] %vm897, %v630
          %920 = vst.msk [vmem:[#allocation2 + $0x30] sm:$0xff] %vm897, %v631
          %921 = vst.msk [vmem:[#allocation2 + $0x38] sm:$0xff] %vm897, %v632
          %922 = vst.msk [vmem:[#allocation2 + $0x40] sm:$0xff] %vm897, %v633
          %923 = vst.msk [vmem:[#allocation2 + $0x48] sm:$0xff] %vm897, %v634
          %924 = vst.msk [vmem:[#allocation2 + $0x50] sm:$0xff] %vm897, %v635
          %925 = vst.msk [vmem:[#allocation2 + $0x58] sm:$0xff] %vm897, %v636
          %926 = vst.msk [vmem:[#allocation2 + $0x60] sm:$0xff] %vm897, %v637
          %927 = vst.msk [vmem:[#allocation2 + $0x68] sm:$0xff] %vm897, %v638
          %928 = vst.msk [vmem:[#allocation2 + $0x70] sm:$0xff] %vm897, %v639
          %929 = vst.msk [vmem:[#allocation2 + $0x78] sm:$0xff] %vm897, %v640
        $region40: #{generator_forward.1} parent=31 // pred_fallthru
          _
        %p930 = scmp.eq.s32.totalorder %s20, 1
        // Predicated region
        $region41: #{generator_forward.1} parent=31 // pred_check
          %p931 = pneg %p930
        $region42: #{generator_forward.1} parent=31 // pred_check_branch
          %933 = sbr.rel (%p931) target = $region44
        $region43: #{generator_forward.1} parent=31 // pred_region
          %v934 = vld [vmem:[#allocation2] sm:$0xff]
          %v935 = vld [vmem:[#allocation2 + $0x8] sm:$0xff]
          %v936 = vld [vmem:[#allocation2 + $0x10] sm:$0xff]
          %v937 = vld [vmem:[#allocation2 + $0x18] sm:$0xff]
          %v938 = vld [vmem:[#allocation2 + $0x20] sm:$0xff]
          %v939 = vld [vmem:[#allocation2 + $0x28] sm:$0xff]
          %v940 = vld [vmem:[#allocation2 + $0x30] sm:$0xff]
          %v941 = vld [vmem:[#allocation2 + $0x38] sm:$0xff]
          %v942 = vld [vmem:[#allocation2 + $0x40] sm:$0xff]
          %v943 = vld [vmem:[#allocation2 + $0x48] sm:$0xff]
          %v944 = vld [vmem:[#allocation2 + $0x50] sm:$0xff]
          %v945 = vld [vmem:[#allocation2 + $0x58] sm:$0xff]
          %v946 = vld [vmem:[#allocation2 + $0x60] sm:$0xff]
          %v947 = vld [vmem:[#allocation2 + $0x68] sm:$0xff]
          %v948 = vld [vmem:[#allocation2 + $0x70] sm:$0xff]
          %v949 = vld [vmem:[#allocation2 + $0x78] sm:$0xff]
          %v950 = vld [vmem:[#allocation3] sm:$0xff]
          %v951 = vld [vmem:[#allocation3 + $0x8] sm:$0xff]
          %v952 = vld [vmem:[#allocation3 + $0x10] sm:$0xff]
          %v953 = vld [vmem:[#allocation3 + $0x18] sm:$0xff]
          %v954 = vld [vmem:[#allocation3 + $0x20] sm:$0xff]
          %v955 = vld [vmem:[#allocation3 + $0x28] sm:$0xff]
          %v956 = vld [vmem:[#allocation3 + $0x30] sm:$0xff]
          %v957 = vld [vmem:[#allocation3 + $0x38] sm:$0xff]
          %v958 = vld [vmem:[#allocation3 + $0x40] sm:$0xff]
          %v959 = vld [vmem:[#allocation3 + $0x48] sm:$0xff]
          %v960 = vld [vmem:[#allocation3 + $0x50] sm:$0xff]
          %v961 = vld [vmem:[#allocation3 + $0x58] sm:$0xff]
          %v962 = vld [vmem:[#allocation3 + $0x60] sm:$0xff]
          %v963 = vld [vmem:[#allocation3 + $0x68] sm:$0xff]
          %v964 = vld [vmem:[#allocation3 + $0x70] sm:$0xff]
          %v965 = vld [vmem:[#allocation3 + $0x78] sm:$0xff]
          %v966 = vlog2.pop %v950
          %v967 = vmul.f32 %v966, 0.6931472
          %v968 = vlog2.pop %v951
          %v969 = vmul.f32 %v968, 0.6931472
          %v970 = vlog2.pop %v952
          %v971 = vmul.f32 %v970, 0.6931472
          %v972 = vlog2.pop %v953
          %v973 = vmul.f32 %v972, 0.6931472
          %v974 = vlog2.pop %v954
          %v975 = vmul.f32 %v974, 0.6931472
          %v976 = vlog2.pop %v955
          %v977 = vmul.f32 %v976, 0.6931472
          %v978 = vlog2.pop %v956
          %v979 = vmul.f32 %v978, 0.6931472
          %v980 = vlog2.pop %v957
          %v981 = vmul.f32 %v980, 0.6931472
          %v982 = vlog2.pop %v958
          %v983 = vmul.f32 %v982, 0.6931472
          %v984 = vlog2.pop %v959
          %v985 = vmul.f32 %v984, 0.6931472
          %v986 = vlog2.pop %v960
          %v987 = vmul.f32 %v986, 0.6931472
          %v988 = vlog2.pop %v961
          %v989 = vmul.f32 %v988, 0.6931472
          %v990 = vlog2.pop %v962
          %v991 = vmul.f32 %v990, 0.6931472
          %v992 = vlog2.pop %v963
          %v993 = vmul.f32 %v992, 0.6931472
          %v994 = vlog2.pop %v964
          %v995 = vmul.f32 %v994, 0.6931472
          %v996 = vlog2.pop %v965
          %v997 = vmul.f32 %v996, 0.6931472
          %v998 = vadd.f32 %v934, %v967
          %v999 = vadd.f32 %v935, %v969
          %v1000 = vadd.f32 %v936, %v971
          %v1001 = vadd.f32 %v937, %v973
          %v1002 = vadd.f32 %v938, %v975
          %v1003 = vadd.f32 %v939, %v977
          %v1004 = vadd.f32 %v940, %v979
          %v1005 = vadd.f32 %v941, %v981
          %v1006 = vadd.f32 %v942, %v983
          %v1007 = vadd.f32 %v943, %v985
          %v1008 = vadd.f32 %v944, %v987
          %v1009 = vadd.f32 %v945, %v989
          %v1010 = vadd.f32 %v946, %v991
          %v1011 = vadd.f32 %v947, %v993
          %v1012 = vadd.f32 %v948, %v995
          %v1013 = vadd.f32 %v949, %v997
          %s1014 = smul.u32 %s21, 128
          %s1015 = scalar_lea.vmem [#allocation4], %s1014
          %v1016 = vld [vmem:[%s1015] sm:$0xff]
          %v1017 = vld [vmem:[%s1015 + $0x8] sm:$0xff]
          %v1018 = vld [vmem:[%s1015 + $0x10] sm:$0xff]
          %v1019 = vld [vmem:[%s1015 + $0x18] sm:$0xff]
          %v1020 = vld [vmem:[%s1015 + $0x20] sm:$0xff]
          %v1021 = vld [vmem:[%s1015 + $0x28] sm:$0xff]
          %v1022 = vld [vmem:[%s1015 + $0x30] sm:$0xff]
          %v1023 = vld [vmem:[%s1015 + $0x38] sm:$0xff]
          %v1024 = vld [vmem:[%s1015 + $0x40] sm:$0xff]
          %v1025 = vld [vmem:[%s1015 + $0x48] sm:$0xff]
          %v1026 = vld [vmem:[%s1015 + $0x50] sm:$0xff]
          %v1027 = vld [vmem:[%s1015 + $0x58] sm:$0xff]
          %v1028 = vld [vmem:[%s1015 + $0x60] sm:$0xff]
          %v1029 = vld [vmem:[%s1015 + $0x68] sm:$0xff]
          %v1030 = vld [vmem:[%s1015 + $0x70] sm:$0xff]
          %v1031 = vld [vmem:[%s1015 + $0x78] sm:$0xff]
          %1033 = vset.pattern.permute.xlu0 0
          %1034 = vperm.xlu0 %1033, %v998
          %v1035 = vpop.permute.xlu0 %1034
          %1038 = vset.pattern.permute.xlu0 0
          %1039 = vperm.xlu0 %1038, %v999
          %v1040 = vpop.permute.xlu0 %1039
          %1043 = vset.pattern.permute.xlu0 0
          %1044 = vperm.xlu0 %1043, %v1000
          %v1045 = vpop.permute.xlu0 %1044
          %1048 = vset.pattern.permute.xlu0 0
          %1049 = vperm.xlu0 %1048, %v1001
          %v1050 = vpop.permute.xlu0 %1049
          %1053 = vset.pattern.permute.xlu0 0
          %1054 = vperm.xlu0 %1053, %v1002
          %v1055 = vpop.permute.xlu0 %1054
          %1058 = vset.pattern.permute.xlu0 0
          %1059 = vperm.xlu0 %1058, %v1003
          %v1060 = vpop.permute.xlu0 %1059
          %1063 = vset.pattern.permute.xlu0 0
          %1064 = vperm.xlu0 %1063, %v1004
          %v1065 = vpop.permute.xlu0 %1064
          %1068 = vset.pattern.permute.xlu0 0
          %1069 = vperm.xlu0 %1068, %v1005
          %v1070 = vpop.permute.xlu0 %1069
          %1073 = vset.pattern.permute.xlu0 0
          %1074 = vperm.xlu0 %1073, %v1006
          %v1075 = vpop.permute.xlu0 %1074
          %1078 = vset.pattern.permute.xlu0 0
          %1079 = vperm.xlu0 %1078, %v1007
          %v1080 = vpop.permute.xlu0 %1079
          %1083 = vset.pattern.permute.xlu0 0
          %1084 = vperm.xlu0 %1083, %v1008
          %v1085 = vpop.permute.xlu0 %1084
          %1088 = vset.pattern.permute.xlu0 0
          %1089 = vperm.xlu0 %1088, %v1009
          %v1090 = vpop.permute.xlu0 %1089
          %1093 = vset.pattern.permute.xlu0 0
          %1094 = vperm.xlu0 %1093, %v1010
          %v1095 = vpop.permute.xlu0 %1094
          %1098 = vset.pattern.permute.xlu0 0
          %1099 = vperm.xlu0 %1098, %v1011
          %v1100 = vpop.permute.xlu0 %1099
          %1103 = vset.pattern.permute.xlu0 0
          %1104 = vperm.xlu0 %1103, %v1012
          %v1105 = vpop.permute.xlu0 %1104
          %1108 = vset.pattern.permute.xlu0 0
          %1109 = vperm.xlu0 %1108, %v1013
          %v1110 = vpop.permute.xlu0 %1109
          %v1112 = vsub.f32 %v1016, %v1035
          %v1113 = vsub.f32 %v1017, %v1040
          %v1114 = vsub.f32 %v1018, %v1045
          %v1115 = vsub.f32 %v1019, %v1050
          %v1116 = vsub.f32 %v1020, %v1055
          %v1117 = vsub.f32 %v1021, %v1060
          %v1118 = vsub.f32 %v1022, %v1065
          %v1119 = vsub.f32 %v1023, %v1070
          %v1120 = vsub.f32 %v1024, %v1075
          %v1121 = vsub.f32 %v1025, %v1080
          %v1122 = vsub.f32 %v1026, %v1085
          %v1123 = vsub.f32 %v1027, %v1090
          %v1124 = vsub.f32 %v1028, %v1095
          %v1125 = vsub.f32 %v1029, %v1100
          %v1126 = vsub.f32 %v1030, %v1105
          %v1127 = vsub.f32 %v1031, %v1110
          %1128 = vst [vmem:[%s250] sm:$0xff] %v1112
          %1129 = vst [vmem:[%s250 + $0x8] sm:$0xff] %v1113
          %1130 = vst [vmem:[%s250 + $0x10] sm:$0xff] %v1114
          %1131 = vst [vmem:[%s250 + $0x18] sm:$0xff] %v1115
          %1132 = vst [vmem:[%s250 + $0x20] sm:$0xff] %v1116
          %1133 = vst [vmem:[%s250 + $0x28] sm:$0xff] %v1117
          %1134 = vst [vmem:[%s250 + $0x30] sm:$0xff] %v1118
          %1135 = vst [vmem:[%s250 + $0x38] sm:$0xff] %v1119
          %1136 = vst [vmem:[%s250 + $0x40] sm:$0xff] %v1120
          %1137 = vst [vmem:[%s250 + $0x48] sm:$0xff] %v1121
          %1138 = vst [vmem:[%s250 + $0x50] sm:$0xff] %v1122
          %1139 = vst [vmem:[%s250 + $0x58] sm:$0xff] %v1123
          %1140 = vst [vmem:[%s250 + $0x60] sm:$0xff] %v1124
          %1141 = vst [vmem:[%s250 + $0x68] sm:$0xff] %v1125
          %1142 = vst [vmem:[%s250 + $0x70] sm:$0xff] %v1126
          %1143 = vst [vmem:[%s250 + $0x78] sm:$0xff] %v1127
        $region44: #{generator_forward.1} parent=31 // pred_fallthru
          _
        %s1144 = sand.u32 %s139, 1
        %s1145 = sand.u32 %s139, 1
        %s1146 = smul.addr %s1145, 128
        %s1147 = scalar_lea.vmem [#allocation5], %s1146
        // Predicated region
        $region45: #{generator_forward.1} parent=31 // pred_check
          %p1148 = pneg %p149
        $region46: #{generator_forward.1} parent=31 // pred_check_branch
          %1150 = sbr.rel (%p1148) target = $region48
        $region47: #{generator_forward.1} parent=31 // pred_region
          %s1151 = smul.u32 %s21, %s20
          %s1152 = smul.u32 16, %s19
          %s1153 = smul.addr %s1152, 3
          %s1154 = sadd.s32 %s1151, %s1153
          %s1155 = smul.addr %s1154, 8
          %s1156 = scalar_lea.vmem %s3, %s1155
          // Predicated region
          $region49: #{generator_forward.1} parent=47 // pred_check
            _
          $region50: #{generator_forward.1} parent=47 // pred_check_branch
            %1158 = sbr.rel (0) target = $region52
          $region51: #{generator_forward.1} parent=47 // pred_region
            // Predicated region
            $region53: #{generator_forward.1} parent=51 // pred_check
              _
            $region54: #{generator_forward.1} parent=51 // pred_check_branch
              %1160 = sbr.rel (0) target = $region56
            $region55: #{generator_forward.1} parent=51 // pred_region
              // Predicated region
              $region68: #{generator_forward.1} parent=55 // pred_check
                _
              $region69: #{generator_forward.1} parent=55 // pred_check_branch
                %1205 = sbr.rel (0) target = $region71
              $region70: #{generator_forward.1} parent=55 // pred_region
                loop: start=0, step=1, limit=1
                $region72: #{generator_forward.1} parent=70 // loop_pre_header
                  _
                $region73: #{generator_forward.1} parent=70 // loop_header
                  %s1207 = sphi 0, %s1211
                  %p1208 = scmp.ge.s32.totalorder %s1207, 1
                  %s1212 = sphi %s1147, %s1147
                  %s1213 = sphi %s1156, %s1156
                $region74: #{generator_forward.1} parent=70 // loop_header_branch
                  %1210 = sbr.rel (%p1208) target = $region78
                $region75: #{generator_forward.1} parent=70 // loop_body
                  %v1214 = vld [vmem:[%s1212] sm:$0xff]
                  %1215 = vst [vmem:[%s1213] sm:$0xff] %v1214
                  %v1216 = vld [vmem:[%s1212 + $0x8] sm:$0xff]
                  %1217 = vst [vmem:[%s1213 + $0x18] sm:$0xff] %v1216
                  %v1218 = vld [vmem:[%s1212 + $0x10] sm:$0xff]
                  %1219 = vst [vmem:[%s1213 + $0x30] sm:$0xff] %v1218
                  %v1220 = vld [vmem:[%s1212 + $0x18] sm:$0xff]
                  %1221 = vst [vmem:[%s1213 + $0x48] sm:$0xff] %v1220
                  %v1222 = vld [vmem:[%s1212 + $0x20] sm:$0xff]
                  %1223 = vst [vmem:[%s1213 + $0x60] sm:$0xff] %v1222
                  %v1224 = vld [vmem:[%s1212 + $0x28] sm:$0xff]
                  %1225 = vst [vmem:[%s1213 + $0x78] sm:$0xff] %v1224
                  %v1226 = vld [vmem:[%s1212 + $0x30] sm:$0xff]
                  %1227 = vst [vmem:[%s1213 + $0x90] sm:$0xff] %v1226
                  %v1228 = vld [vmem:[%s1212 + $0x38] sm:$0xff]
                  %1229 = vst [vmem:[%s1213 + $0xa8] sm:$0xff] %v1228
                  %v1230 = vld [vmem:[%s1212 + $0x40] sm:$0xff]
                  %1231 = vst [vmem:[%s1213 + $0xc0] sm:$0xff] %v1230
                  %v1232 = vld [vmem:[%s1212 + $0x48] sm:$0xff]
                  %1233 = vst [vmem:[%s1213 + $0xd8] sm:$0xff] %v1232
                  %v1234 = vld [vmem:[%s1212 + $0x50] sm:$0xff]
                  %1235 = vst [vmem:[%s1213 + $0xf0] sm:$0xff] %v1234
                  %v1236 = vld [vmem:[%s1212 + $0x58] sm:$0xff]
                  %1237 = vst [vmem:[%s1213 + $0x108] sm:$0xff] %v1236
                  %v1238 = vld [vmem:[%s1212 + $0x60] sm:$0xff]
                  %1239 = vst [vmem:[%s1213 + $0x120] sm:$0xff] %v1238
                  %v1240 = vld [vmem:[%s1212 + $0x68] sm:$0xff]
                  %1241 = vst [vmem:[%s1213 + $0x138] sm:$0xff] %v1240
                  %v1242 = vld [vmem:[%s1212 + $0x70] sm:$0xff]
                  %1243 = vst [vmem:[%s1213 + $0x150] sm:$0xff] %v1242
                  %v1244 = vld [vmem:[%s1212 + $0x78] sm:$0xff]
                  %1245 = vst [vmem:[%s1213 + $0x168] sm:$0xff] %v1244
                $region76: #{generator_forward.1} parent=70 // loop_footer
                  %s1211 = sadd.s32 1, %s1207
                $region77: #{generator_forward.1} parent=70 // loop_footer_branch
                  %1206 = sbr.rel target = $region73
                $region78: #{generator_forward.1} parent=70 // loop_exit
                  _
              $region71: #{generator_forward.1} parent=55 // pred_fallthru
                _
              // Predicated region
              $region79: #{generator_forward.1} parent=55 // pred_check
                _
              $region80: #{generator_forward.1} parent=55 // pred_check_branch
                %1247 = sbr.rel target = $region82
              $region81: #{generator_forward.1} parent=55 // pred_region
                _
              $region82: #{generator_forward.1} parent=55 // pred_fallthru
                _
            $region56: #{generator_forward.1} parent=51 // pred_fallthru
              _
            // Predicated region
            $region57: #{generator_forward.1} parent=51 // pred_check
              _
            $region58: #{generator_forward.1} parent=51 // pred_check_branch
              %1162 = sbr.rel target = $region60
            $region59: #{generator_forward.1} parent=51 // pred_region
              loop: start=0, step=1, limit=1
              $region61: #{generator_forward.1} parent=59 // loop_pre_header
                _
              $region62: #{generator_forward.1} parent=59 // loop_header
                %s1165 = sphi 0, %s1169
                %p1166 = scmp.ge.s32.totalorder %s1165, 1
                %s1170 = sphi %s1147, %s1147
                %s1171 = sphi %s1156, %s1156
              $region63: #{generator_forward.1} parent=59 // loop_header_branch
                %1168 = sbr.rel (%p1166) target = $region67
              $region64: #{generator_forward.1} parent=59 // loop_body
                %v1172 = vld [vmem:[%s1170] sm:$0xff]
                %1173 = vst [vmem:[%s1171] sm:$0xff] %v1172
                %v1174 = vld [vmem:[%s1170 + $0x8] sm:$0xff]
                %1175 = vst [vmem:[%s1171 + $0x18] sm:$0xff] %v1174
                %v1176 = vld [vmem:[%s1170 + $0x10] sm:$0xff]
                %1177 = vst [vmem:[%s1171 + $0x30] sm:$0xff] %v1176
                %v1178 = vld [vmem:[%s1170 + $0x18] sm:$0xff]
                %1179 = vst [vmem:[%s1171 + $0x48] sm:$0xff] %v1178
                %v1180 = vld [vmem:[%s1170 + $0x20] sm:$0xff]
                %1181 = vst [vmem:[%s1171 + $0x60] sm:$0xff] %v1180
                %v1182 = vld [vmem:[%s1170 + $0x28] sm:$0xff]
                %1183 = vst [vmem:[%s1171 + $0x78] sm:$0xff] %v1182
                %v1184 = vld [vmem:[%s1170 + $0x30] sm:$0xff]
                %1185 = vst [vmem:[%s1171 + $0x90] sm:$0xff] %v1184
                %v1186 = vld [vmem:[%s1170 + $0x38] sm:$0xff]
                %1187 = vst [vmem:[%s1171 + $0xa8] sm:$0xff] %v1186
                %v1188 = vld [vmem:[%s1170 + $0x40] sm:$0xff]
                %1189 = vst [vmem:[%s1171 + $0xc0] sm:$0xff] %v1188
                %v1190 = vld [vmem:[%s1170 + $0x48] sm:$0xff]
                %1191 = vst [vmem:[%s1171 + $0xd8] sm:$0xff] %v1190
                %v1192 = vld [vmem:[%s1170 + $0x50] sm:$0xff]
                %1193 = vst [vmem:[%s1171 + $0xf0] sm:$0xff] %v1192
                %v1194 = vld [vmem:[%s1170 + $0x58] sm:$0xff]
                %1195 = vst [vmem:[%s1171 + $0x108] sm:$0xff] %v1194
                %v1196 = vld [vmem:[%s1170 + $0x60] sm:$0xff]
                %1197 = vst [vmem:[%s1171 + $0x120] sm:$0xff] %v1196
                %v1198 = vld [vmem:[%s1170 + $0x68] sm:$0xff]
                %1199 = vst [vmem:[%s1171 + $0x138] sm:$0xff] %v1198
                %v1200 = vld [vmem:[%s1170 + $0x70] sm:$0xff]
                %1201 = vst [vmem:[%s1171 + $0x150] sm:$0xff] %v1200
                %v1202 = vld [vmem:[%s1170 + $0x78] sm:$0xff]
                %1203 = vst [vmem:[%s1171 + $0x168] sm:$0xff] %v1202
              $region65: #{generator_forward.1} parent=59 // loop_footer
                %s1169 = sadd.s32 1, %s1165
              $region66: #{generator_forward.1} parent=59 // loop_footer_branch
                %1164 = sbr.rel target = $region62
              $region67: #{generator_forward.1} parent=59 // loop_exit
                _
            $region60: #{generator_forward.1} parent=51 // pred_fallthru
              _
          $region52: #{generator_forward.1} parent=47 // pred_fallthru
            _
          %1248 = vnop
        $region48: #{generator_forward.1} parent=31 // pred_fallthru
          _
      $region32: #{generator_forward.1} parent=5 // pred_fallthru
        _
      %p1249 = scmp.le.s32.totalorder 2, %s9
      // Predicated region
      $region83: #{generator_forward.1} parent=5 // pred_check
        %p1250 = pneg %p1249
      $region84: #{generator_forward.1} parent=5 // pred_check_branch
        %1252 = sbr.rel (%p1250) target = $region86
      $region85: #{generator_forward.1} parent=5 // pred_region
        %s1253 = ssub.s32 %s9, 2
        // Predicated region
        $region87: #{generator_forward.1} parent=85 // pred_check
          %p1254 = pneg %p155
        $region88: #{generator_forward.1} parent=85 // pred_check_branch
          %1256 = sbr.rel (%p1254) target = $region90
        $region89: #{generator_forward.1} parent=85 // pred_region
          %s1257 = sand.u32 %s140, 1
          %s1258 = sand.u32 %s140, 1
          %s1259 = smul.addr %s1258, 128
          %s1260 = scalar_lea.vmem [#allocation5], %s1259
        $region90: #{generator_forward.1} parent=85 // pred_fallthru
          _
      $region86: #{generator_forward.1} parent=5 // pred_fallthru
        _
    $region6: #{generator_forward.1} parent=1 // loop_footer
      %s13 = sadd.s32 1, %s9
    $region7: #{generator_forward.1} parent=1 // loop_footer_branch
      %8 = sbr.rel target = $region3
    $region8: #{generator_forward.1} parent=1 // loop_exit
      _

</llo_original>
